<compile_context>
chip_gen: v5e
topology: v5e:2x2
jax: 0.10.0
libtpu: 0.0.40
codegen_flags: <defaults>
</compile_context>

<pallas_src>
import math
import numpy as np
import jax
import jax.numpy as jnp
from jax.experimental import pallas as pl
from jax.experimental.pallas import tpu as pltpu

NUM_TOKENS = 2          # Ising spins (2 tokens); K==2 folds below depend on this
SEQ_LENGTH = 8
TOK_EMB_DIM = 4
HIDDEN_DIM = 32         # small-shape choice consistent with the demo sizes
NUM_LAYERS = 3          # kernel below is written for num_layers == 3
MAX_TILE_N = 2048       # upper bound on rows (lanes) per grid step


def _gelu(x):
    # TODO(synk): PyTorch nn.GELU() default is the exact erf form; we use the
    # tanh approximation (max abs diff ~3e-4) since erf lowering in Mosaic is
    # not guaranteed.  The JAX reference below uses the same variant.
    return jax.nn.gelu(x, approximate=True)


def _freqs():
    half = HIDDEN_DIM // 2
    scale = math.log(10000.0) / (half - 1)
    return jnp.exp(jnp.arange(half, dtype=jnp.float32) * -scale)


def _pick_tile(n):
    """Largest tile <= MAX_TILE_N that still leaves >=2 grid blocks when possible."""
    half_rounded = -(-((n + 1) // 2) // 128) * 128
    return max(128, min(MAX_TILE_N, half_rounded))


# ---------------------------------------------------------------------------
# Pallas kernel: one grid step processes TILE_N rows (mapped to lanes).
# Every activation is [features (sublanes), rows (lanes)].
# ---------------------------------------------------------------------------
def _flow_kernel(x_ref, t_ref, freqs_ref, wt1T_ref, wdelta_ref, whT_ref,
                 bias_ref, wf_ref, bf_ref, out_ref):
    f32 = jnp.float32
    x_f32 = x_ref[...].astype(f32)                   # [L, T] tokens as f32 (shared)
    t = t_ref[...]                                   # [1, T] f32 times

    # --- time embedding: sinusoidal feats -> Linear -> GELU (Linear #2 folded) ---
    arg = freqs_ref[...] * t                         # [H/2,1]*[1,T] -> [H/2,T]
    sincos = jnp.concatenate([jnp.sin(arg), jnp.cos(arg)], axis=0)   # [H, T]
    h = _gelu(jnp.dot(wt1T_ref[...], sincos, preferred_element_type=f32)
              + bias_ref[0])                         # [H, T]

    # --- flow layer 1: x-path (gather + K=2 one-hot fold) + t-path (wt2@w1t fold) ---
    z = (jnp.dot(whT_ref[0], h, preferred_element_type=f32)
         + jnp.dot(wdelta_ref[...], x_f32, preferred_element_type=f32)
         + bias_ref[1])
    z = _gelu(z)

    # --- hidden layers (num_layers - 1 == 2 of them) ---
    z = _gelu(jnp.dot(whT_ref[1], z, preferred_element_type=f32) + bias_ref[2])
    z = _gelu(jnp.dot(whT_ref[2], z, preferred_element_type=f32) + bias_ref[3])

    # --- head Linear(H, 1): VPU mul + sublane reduce -> lane-dense [1, T] ---
    flow = jnp.sum(wf_ref[...] * z, axis=0, keepdims=True) + bf_ref[0, 0]

    # --- 1-D open-chain Ising energy (J=1); module returns -energy_fn(x)+flow ---
    L = x_f32.shape[0]
    s = 2.0 * x_f32 - 1.0                            # spins {-1,+1}, [L, T]
    prod = s * pltpu.roll(s, shift=L - 1, axis=0)    # prod[p] = s[p]*s[(p+1) % L]
    neigh = jnp.sum(prod, axis=0, keepdims=True) - prod[L - 1:, :]   # drop wrap term
    out_ref[...] = neigh + flow                      # == -energy + flow_value


# ---------------------------------------------------------------------------
# Parameters (PyTorch-like) + exact algebraic folds done once in the wrapper.
# ---------------------------------------------------------------------------
def init_params(key):
    d1 = SEQ_LENGTH * TOK_EMB_DIM
    H = HIDDEN_DIM
    shapes = dict(
        emb_table=(NUM_TOKENS, TOK_EMB_DIM),
        wt1=(H, H), bt1=(1, H), wt2=(H, H), bt2=(1, H),
        w1x=(d1, H), w1t=(H, H), b1=(1, H),
        w2=(H, H), b2=(1, H),
        w3=(H, H), b3=(1, H),
        wf=(H, 1), bf=(1, 1),
    )
    keys = jax.random.split(key, len(shapes))
    return {name: 0.1 * jax.random.normal(k, shape, jnp.float32)
            for (name, shape), k in zip(shapes.items(), keys)}


def _prepare_params(params):
    """Exact folds + transposes so the kernel runs rows-on-lanes (all f32)."""
    H, L, D = HIDDEN_DIM, SEQ_LENGTH, TOK_EMB_DIM
    half = H // 2
    # time-MLP Linear #2 folded into flow layer 1 (no nonlinearity in between)
    w_comb = params["wt2"] @ params["w1t"]                        # (H, H)
    b_comb = params["bt2"] @ params["w1t"] + params["b1"]         # (1, H)
    # embedding gather + layer-1 x-path -> per-token (H, L) matrices
    w1x_r = params["w1x"].reshape(L, D, H)
    wtok = jnp.einsum("kd,pdh->kph", params["emb_table"], w1x_r)  # (K, L, H)
    wtokT = jnp.transpose(wtok, (0, 2, 1))                        # (K, H, L)
    # K == 2 one-hot fold: onehot0 = 1-x, onehot1 = x  =>
    #   sum_k wtokT[k] @ onehot_k = rowsum(wtokT[0]) + (wtokT[1]-wtokT[0]) @ x
    assert NUM_TOKENS == 2, "one-hot delta fold and Ising spins assume 2 tokens"
    wdelta = wtokT[1] - wtokT[0]                                  # (H, L)
    bias1 = b_comb.reshape(H, 1) + jnp.sum(wtokT[0], axis=1, keepdims=True)
    # transposed weights (features on sublanes, rows on lanes)
    wt1T = params["wt1"].T                                        # (H, H), sin|cos columns
    whT = jnp.stack([w_comb.T, params["w2"].T, params["w3"].T])   # (3, H, H)
    biases = jnp.stack([params["bt1"].reshape(H, 1),
                        bias1,
                        params["b2"].reshape(H, 1),
                        params["b3"].reshape(H, 1)])              # (4, H, 1)
    freqs_col = _freqs().reshape(half, 1)                         # (H/2, 1)
    return freqs_col, wt1T, wdelta, whT, biases, params["wf"], params["bf"]


def discrete_state_flow(params, x, t):
    """x: [B, *, L] int tokens, t: [B, *] times -> -ising_energy(x) + flow, [B, *]."""
    *batch_dims, L = x.shape
    batch_dims = tuple(batch_dims)
    N = int(np.prod(batch_dims)) if batch_dims else 1
    H = HIDDEN_DIM
    half = H // 2

    tile_n = _pick_tile(N)
    n_blocks = pl.cdiv(N, tile_n)
    n_pad = n_blocks * tile_n

    # TODO(synk): for large N, producers should emit (L, N)/(1, N) layouts directly
    # (or allow_input_fusion) so these transpose/pad copies fuse away.
    x_flat = x.reshape(N, L).astype(jnp.int32)
    t_flat = t.reshape(N).astype(jnp.float32)
    pad = n_pad - N
    if pad:
        x_flat = jnp.pad(x_flat, ((0, pad), (0, 0)))
        t_flat = jnp.pad(t_flat, ((0, pad),))
    x_T = x_flat.T                      # (L, n_pad): rows are lane-dense
    t_row = t_flat.reshape(1, n_pad)    # (1, n_pad)

    freqs_col, wt1T, wdelta, whT, biases, wf_col, bf = _prepare_params(params)

    def const_spec(shape):
        zeros = (0,) * len(shape)
        return pl.BlockSpec(shape, lambda i, _z=zeros: _z)

    out = pl.pallas_call(
        _flow_kernel,
        out_shape=jax.ShapeDtypeStruct((1, n_pad), jnp.float32),
        grid=(n_blocks,),
        in_specs=[
            pl.BlockSpec((L, tile_n), lambda i: (0, i)),        # tokens (lane-dense)
            pl.BlockSpec((1, tile_n), lambda i: (0, i)),        # t      (lane-dense)
            const_spec((half, 1)),                              # sinusoid freqs
            const_spec((H, H)),                                 # wt1^T (sin|cos cols)
            const_spec((H, L)),                                 # folded token-delta W
            const_spec((3, H, H)),                              # W_comb^T, w2^T, w3^T
            const_spec((4, H, 1)),                              # bt1|b1'|b2|b3
            const_spec((H, 1)),                                 # head weights
            pl.BlockSpec(memory_space=pltpu.MemorySpace.SMEM),  # head bias scalar
        ],
        out_specs=pl.BlockSpec((1, tile_n), lambda i: (0, i)),  # lane-dense output
        compiler_params=pltpu.CompilerParams(
            dimension_semantics=("parallel",)),
    )(x_T, t_row, freqs_col, wt1T, wdelta, whT, biases, wf_col, bf)

    return out[0, :N].reshape(batch_dims)


# ---------------------------------------------------------------------------
# Pure-JAX reference mirroring the PyTorch forward (same GELU / energy_fn).
# ---------------------------------------------------------------------------
def ising_energy(x):
    """Example energy_fn: open-chain nearest-neighbour Ising energy, J = 1."""
    s = (2 * x - 1).astype(jnp.float32)
    return -jnp.sum(s[..., :-1] * s[..., 1:], axis=-1)


def reference(params, x, t):
    *batch_dims, L = x.shape
    energy = ising_energy(x)
    x_emb = jnp.take(params["emb_table"], x, axis=0).reshape(*batch_dims,
                                                             L * TOK_EMB_DIM)
    arg = t[..., None] * _freqs()
    sin_emb = jnp.concatenate([jnp.sin(arg), jnp.cos(arg)], axis=-1)
    h = _gelu(sin_emb @ params["wt1"] + params["bt1"])
    t_emb = h @ params["wt2"] + params["bt2"]
    combined = jnp.concatenate([x_emb, t_emb], axis=-1)
    w1 = jnp.concatenate([params["w1x"], params["w1t"]], axis=0)
    z = _gelu(combined @ w1 + params["b1"])
    z = _gelu(z @ params["w2"] + params["b2"])
    z = _gelu(z @ params["w3"] + params["b3"])
    flow = (z @ params["wf"] + params["bf"])[..., 0]
    return -energy + flow


if __name__ == "__main__":
    key = jax.random.PRNGKey(0)
    kp, kx, kt = jax.random.split(key, 3)
    params = init_params(kp)

    # x: [B, *, L] discrete Ising grid state, t: [B, *] time
    x = jax.random.randint(kx, (2, 4, SEQ_LENGTH), 0, NUM_TOKENS, dtype=jnp.int32)
    t = jax.random.uniform(kt, (2, 4), dtype=jnp.float32)

    out = jax.block_until_ready(discrete_state_flow(params, x, t))
    assert out.shape == (2, 4)

    ref = reference(params, x, t)
    np.testing.assert_allclose(np.asarray(out), np.asarray(ref),
                               rtol=1e-5, atol=1e-5)
    print("KERNEL_OK")
</pallas_src>

<mosaic_0001>
module attributes {stable_mosaic.version = 11 : i64} {
  func.func @_flow_kernel(%arg0: i32, %arg1: memref<8x128xi32, #tpu.memory_space<vmem>>, %arg2: memref<1x128xf32, #tpu.memory_space<vmem>>, %arg3: memref<16x1xf32, #tpu.memory_space<vmem>>, %arg4: memref<32x32xf32, #tpu.memory_space<vmem>>, %arg5: memref<32x8xf32, #tpu.memory_space<vmem>>, %arg6: memref<3x32x32xf32, #tpu.memory_space<vmem>>, %arg7: memref<4x32x1xf32, #tpu.memory_space<vmem>>, %arg8: memref<32x1xf32, #tpu.memory_space<vmem>>, %arg9: memref<1x1xf32, #tpu.memory_space<smem>>, %arg10: memref<1x128xf32, #tpu.memory_space<vmem>>) attributes {dimension_semantics = [#tpu.dimension_semantics<parallel>], iteration_bounds = array<i64: 1>, scalar_prefetch = 0 : i64, scratch_operands = 0 : i64, tpu.core_type = #tpu.core_type<tc>, window_params = [{transform_indices = @transform_0, window_bounds = array<i64: 8, 128>}, {transform_indices = @transform_1, window_bounds = array<i64: 1, 128>}, {pipeline_mode = #tpu.pipeline_mode<synchronous>, transform_indices = @transform_2, window_bounds = array<i64: 16, 1>}, {pipeline_mode = #tpu.pipeline_mode<synchronous>, transform_indices = @transform_3, window_bounds = array<i64: 32, 32>}, {pipeline_mode = #tpu.pipeline_mode<synchronous>, transform_indices = @transform_4, window_bounds = array<i64: 32, 8>}, {pipeline_mode = #tpu.pipeline_mode<synchronous>, transform_indices = @transform_5, window_bounds = array<i64: 3, 32, 32>}, {pipeline_mode = #tpu.pipeline_mode<synchronous>, transform_indices = @transform_6, window_bounds = array<i64: 4, 32, 1>}, {pipeline_mode = #tpu.pipeline_mode<synchronous>, transform_indices = @transform_7, window_bounds = array<i64: 32, 1>}, {transform_indices = @transform_8, window_bounds = array<i64: 1, 1>}, {transform_indices = @transform_9, window_bounds = array<i64: 1, 128>}]} {
    %c0 = arith.constant 0 : index
    %c0_0 = arith.constant 0 : index
    %0 = vector.load %arg1[%c0, %c0_0] : memref<8x128xi32, #tpu.memory_space<vmem>>, vector<8x128xi32>
    %1 = arith.sitofp %0 : vector<8x128xi32> to vector<8x128xf32>
    %c0_1 = arith.constant 0 : index
    %c0_2 = arith.constant 0 : index
    %2 = vector.load %arg2[%c0_1, %c0_2] : memref<1x128xf32, #tpu.memory_space<vmem>>, vector<1x128xf32>
    %c0_3 = arith.constant 0 : index
    %c0_4 = arith.constant 0 : index
    %3 = vector.load %arg3[%c0_3, %c0_4] : memref<16x1xf32, #tpu.memory_space<vmem>>, vector<16x1xf32>
    %4 = vector.broadcast %3 : vector<16x1xf32> to vector<16x128xf32>
    %5 = vector.broadcast %2 : vector<1x128xf32> to vector<16x128xf32>
    %6 = arith.mulf %4, %5 : vector<16x128xf32>
    %7 = math.sin %6 : vector<16x128xf32>
    %8 = math.cos %6 : vector<16x128xf32>
    %9 = tpu.concatenate %7, %8 in 0 : vector<16x128xf32>, vector<16x128xf32> -> vector<32x128xf32>
    %c0_5 = arith.constant 0 : index
    %c0_6 = arith.constant 0 : index
    %10 = vector.load %arg4[%c0_5, %c0_6] : memref<32x32xf32, #tpu.memory_space<vmem>>, vector<32x32xf32>
    %cst = arith.constant dense<0.000000e+00> : vector<32x128xf32>
    %11 = tpu.matmul %10, %9, %cst {dimension_numbers = #tpu.dot_dimension_numbers<[1], [0], [0], [1], [0, 0, 1, 1], [], []>} : vector<32x32xf32>, vector<32x128xf32>, vector<32x128xf32> -> vector<32x128xf32>
    %c0_7 = arith.constant 0 : index
    %c0_8 = arith.constant 0 : index
    %c0_9 = arith.constant 0 : index
    %12 = vector.load %arg7[%c0_7, %c0_8, %c0_9] : memref<4x32x1xf32, #tpu.memory_space<vmem>>, vector<1x32x1xf32>
    %13 = vector.shape_cast %12 : vector<1x32x1xf32> to vector<32x1xf32>
    %14 = vector.broadcast %13 : vector<32x1xf32> to vector<32x128xf32>
    %15 = arith.addf %11, %14 : vector<32x128xf32>
    %16 = arith.mulf %15, %15 : vector<32x128xf32>
    %17 = arith.mulf %15, %16 : vector<32x128xf32>
    %cst_10 = arith.constant 4.471500e-02 : f32
    %18 = vector.broadcast %cst_10 : f32 to vector<32x128xf32>
    %19 = arith.mulf %18, %17 : vector<32x128xf32>
    %20 = arith.addf %15, %19 : vector<32x128xf32>
    %cst_11 = arith.constant 0.797884583 : f32
    %21 = vector.broadcast %cst_11 : f32 to vector<32x128xf32>
    %22 = arith.mulf %21, %20 : vector<32x128xf32>
    %23 = math.tanh %22 : vector<32x128xf32>
    %cst_12 = arith.constant 1.000000e+00 : f32
    %24 = vector.broadcast %cst_12 : f32 to vector<32x128xf32>
    %25 = arith.addf %24, %23 : vector<32x128xf32>
    %cst_13 = arith.constant 5.000000e-01 : f32
    %26 = vector.broadcast %cst_13 : f32 to vector<32x128xf32>
    %27 = arith.mulf %26, %25 : vector<32x128xf32>
    %28 = arith.mulf %15, %27 : vector<32x128xf32>
    %c0_14 = arith.constant 0 : index
    %c0_15 = arith.constant 0 : index
    %c0_16 = arith.constant 0 : index
    %29 = vector.load %arg6[%c0_14, %c0_15, %c0_16] : memref<3x32x32xf32, #tpu.memory_space<vmem>>, vector<1x32x32xf32>
    %30 = vector.shape_cast %29 : vector<1x32x32xf32> to vector<32x32xf32>
    %cst_17 = arith.constant dense<0.000000e+00> : vector<32x128xf32>
    %31 = tpu.matmul %30, %28, %cst_17 {dimension_numbers = #tpu.dot_dimension_numbers<[1], [0], [0], [1], [0, 0, 1, 1], [], []>} : vector<32x32xf32>, vector<32x128xf32>, vector<32x128xf32> -> vector<32x128xf32>
    %c0_18 = arith.constant 0 : index
    %c0_19 = arith.constant 0 : index
    %32 = vector.load %arg5[%c0_18, %c0_19] : memref<32x8xf32, #tpu.memory_space<vmem>>, vector<32x8xf32>
    %cst_20 = arith.constant dense<0.000000e+00> : vector<32x128xf32>
    %33 = tpu.matmul %32, %1, %cst_20 {dimension_numbers = #tpu.dot_dimension_numbers<[1], [0], [0], [1], [0, 0, 1, 1], [], []>} : vector<32x8xf32>, vector<8x128xf32>, vector<32x128xf32> -> vector<32x128xf32>
    %34 = arith.addf %31, %33 : vector<32x128xf32>
    %c1 = arith.constant 1 : index
    %c0_21 = arith.constant 0 : index
    %c0_22 = arith.constant 0 : index
    %35 = vector.load %arg7[%c1, %c0_21, %c0_22] : memref<4x32x1xf32, #tpu.memory_space<vmem>>, vector<1x32x1xf32>
    %36 = vector.shape_cast %35 : vector<1x32x1xf32> to vector<32x1xf32>
    %37 = vector.broadcast %36 : vector<32x1xf32> to vector<32x128xf32>
    %38 = arith.addf %34, %37 : vector<32x128xf32>
    %39 = arith.mulf %38, %38 : vector<32x128xf32>
    %40 = arith.mulf %38, %39 : vector<32x128xf32>
    %cst_23 = arith.constant 4.471500e-02 : f32
    %41 = vector.broadcast %cst_23 : f32 to vector<32x128xf32>
    %42 = arith.mulf %41, %40 : vector<32x128xf32>
    %43 = arith.addf %38, %42 : vector<32x128xf32>
    %cst_24 = arith.constant 0.797884583 : f32
    %44 = vector.broadcast %cst_24 : f32 to vector<32x128xf32>
    %45 = arith.mulf %44, %43 : vector<32x128xf32>
    %46 = math.tanh %45 : vector<32x128xf32>
    %cst_25 = arith.constant 1.000000e+00 : f32
    %47 = vector.broadcast %cst_25 : f32 to vector<32x128xf32>
    %48 = arith.addf %47, %46 : vector<32x128xf32>
    %cst_26 = arith.constant 5.000000e-01 : f32
    %49 = vector.broadcast %cst_26 : f32 to vector<32x128xf32>
    %50 = arith.mulf %49, %48 : vector<32x128xf32>
    %51 = arith.mulf %38, %50 : vector<32x128xf32>
    %c1_27 = arith.constant 1 : index
    %c0_28 = arith.constant 0 : index
    %c0_29 = arith.constant 0 : index
    %52 = vector.load %arg6[%c1_27, %c0_28, %c0_29] : memref<3x32x32xf32, #tpu.memory_space<vmem>>, vector<1x32x32xf32>
    %53 = vector.shape_cast %52 : vector<1x32x32xf32> to vector<32x32xf32>
    %cst_30 = arith.constant dense<0.000000e+00> : vector<32x128xf32>
    %54 = tpu.matmul %53, %51, %cst_30 {dimension_numbers = #tpu.dot_dimension_numbers<[1], [0], [0], [1], [0, 0, 1, 1], [], []>} : vector<32x32xf32>, vector<32x128xf32>, vector<32x128xf32> -> vector<32x128xf32>
    %c2 = arith.constant 2 : index
    %c0_31 = arith.constant 0 : index
    %c0_32 = arith.constant 0 : index
    %55 = vector.load %arg7[%c2, %c0_31, %c0_32] : memref<4x32x1xf32, #tpu.memory_space<vmem>>, vector<1x32x1xf32>
    %56 = vector.shape_cast %55 : vector<1x32x1xf32> to vector<32x1xf32>
    %57 = vector.broadcast %56 : vector<32x1xf32> to vector<32x128xf32>
    %58 = arith.addf %54, %57 : vector<32x128xf32>
    %59 = arith.mulf %58, %58 : vector<32x128xf32>
    %60 = arith.mulf %58, %59 : vector<32x128xf32>
    %cst_33 = arith.constant 4.471500e-02 : f32
    %61 = vector.broadcast %cst_33 : f32 to vector<32x128xf32>
    %62 = arith.mulf %61, %60 : vector<32x128xf32>
    %63 = arith.addf %58, %62 : vector<32x128xf32>
    %cst_34 = arith.constant 0.797884583 : f32
    %64 = vector.broadcast %cst_34 : f32 to vector<32x128xf32>
    %65 = arith.mulf %64, %63 : vector<32x128xf32>
    %66 = math.tanh %65 : vector<32x128xf32>
    %cst_35 = arith.constant 1.000000e+00 : f32
    %67 = vector.broadcast %cst_35 : f32 to vector<32x128xf32>
    %68 = arith.addf %67, %66 : vector<32x128xf32>
    %cst_36 = arith.constant 5.000000e-01 : f32
    %69 = vector.broadcast %cst_36 : f32 to vector<32x128xf32>
    %70 = arith.mulf %69, %68 : vector<32x128xf32>
    %71 = arith.mulf %58, %70 : vector<32x128xf32>
    %c2_37 = arith.constant 2 : index
    %c0_38 = arith.constant 0 : index
    %c0_39 = arith.constant 0 : index
    %72 = vector.load %arg6[%c2_37, %c0_38, %c0_39] : memref<3x32x32xf32, #tpu.memory_space<vmem>>, vector<1x32x32xf32>
    %73 = vector.shape_cast %72 : vector<1x32x32xf32> to vector<32x32xf32>
    %cst_40 = arith.constant dense<0.000000e+00> : vector<32x128xf32>
    %74 = tpu.matmul %73, %71, %cst_40 {dimension_numbers = #tpu.dot_dimension_numbers<[1], [0], [0], [1], [0, 0, 1, 1], [], []>} : vector<32x32xf32>, vector<32x128xf32>, vector<32x128xf32> -> vector<32x128xf32>
    %c3 = arith.constant 3 : index
    %c0_41 = arith.constant 0 : index
    %c0_42 = arith.constant 0 : index
    %75 = vector.load %arg7[%c3, %c0_41, %c0_42] : memref<4x32x1xf32, #tpu.memory_space<vmem>>, vector<1x32x1xf32>
    %76 = vector.shape_cast %75 : vector<1x32x1xf32> to vector<32x1xf32>
    %77 = vector.broadcast %76 : vector<32x1xf32> to vector<32x128xf32>
    %78 = arith.addf %74, %77 : vector<32x128xf32>
    %79 = arith.mulf %78, %78 : vector<32x128xf32>
    %80 = arith.mulf %78, %79 : vector<32x128xf32>
    %cst_43 = arith.constant 4.471500e-02 : f32
    %81 = vector.broadcast %cst_43 : f32 to vector<32x128xf32>
    %82 = arith.mulf %81, %80 : vector<32x128xf32>
    %83 = arith.addf %78, %82 : vector<32x128xf32>
    %cst_44 = arith.constant 0.797884583 : f32
    %84 = vector.broadcast %cst_44 : f32 to vector<32x128xf32>
    %85 = arith.mulf %84, %83 : vector<32x128xf32>
    %86 = math.tanh %85 : vector<32x128xf32>
    %cst_45 = arith.constant 1.000000e+00 : f32
    %87 = vector.broadcast %cst_45 : f32 to vector<32x128xf32>
    %88 = arith.addf %87, %86 : vector<32x128xf32>
    %cst_46 = arith.constant 5.000000e-01 : f32
    %89 = vector.broadcast %cst_46 : f32 to vector<32x128xf32>
    %90 = arith.mulf %89, %88 : vector<32x128xf32>
    %91 = arith.mulf %78, %90 : vector<32x128xf32>
    %c0_47 = arith.constant 0 : index
    %c0_48 = arith.constant 0 : index
    %92 = vector.load %arg8[%c0_47, %c0_48] : memref<32x1xf32, #tpu.memory_space<vmem>>, vector<32x1xf32>
    %93 = vector.broadcast %92 : vector<32x1xf32> to vector<32x128xf32>
    %94 = arith.mulf %93, %91 : vector<32x128xf32>
    %cst_49 = arith.constant dense<0.000000e+00> : vector<128xf32>
    %95 = vector.multi_reduction <add>, %94, %cst_49 [0] : vector<32x128xf32> to vector<128xf32>
    %96 = vector.shape_cast %95 : vector<128xf32> to vector<1x128xf32>
    %c0_50 = arith.constant 0 : index
    %c0_51 = arith.constant 0 : index
    %97 = memref.load %arg9[%c0_50, %c0_51] : memref<1x1xf32, #tpu.memory_space<smem>>
    %98 = vector.broadcast %97 : f32 to vector<1x128xf32>
    %99 = arith.addf %96, %98 : vector<1x128xf32>
    %cst_52 = arith.constant 2.000000e+00 : f32
    %100 = vector.broadcast %cst_52 : f32 to vector<8x128xf32>
    %101 = arith.mulf %100, %1 : vector<8x128xf32>
    %cst_53 = arith.constant 1.000000e+00 : f32
    %102 = vector.broadcast %cst_53 : f32 to vector<8x128xf32>
    %103 = arith.subf %101, %102 : vector<8x128xf32>
    %c7_i32 = arith.constant 7 : i32
    %104 = tpu.dynamic_rotate %103 by %c7_i32 dim 0 : vector<8x128xf32>, i32 -> vector<8x128xf32>
    %105 = arith.mulf %103, %104 : vector<8x128xf32>
    %cst_54 = arith.constant dense<0.000000e+00> : vector<128xf32>
    %106 = vector.multi_reduction <add>, %105, %cst_54 [0] : vector<8x128xf32> to vector<128xf32>
    %107 = vector.shape_cast %106 : vector<128xf32> to vector<1x128xf32>
    %108 = vector.extract_strided_slice %105 {offsets = [7, 0], sizes = [1, 128], strides = [1, 1]} : vector<8x128xf32> to vector<1x128xf32>
    %109 = arith.subf %107, %108 : vector<1x128xf32>
    %110 = arith.addf %109, %99 : vector<1x128xf32>
    %c0_55 = arith.constant 0 : index
    %c0_56 = arith.constant 0 : index
    %111 = vector.load %arg10[%c0_55, %c0_56] : memref<1x128xf32, #tpu.memory_space<vmem>>, vector<1x128xf32>
    tpu.vector_store %arg10[%c0_55, %c0_56], %110 {strides = array<i32>} : memref<1x128xf32, #tpu.memory_space<vmem>>, vector<1x128xf32>,
    return
  }
  func.func @transform_0(%arg0: i32) -> (i32, i32) {
    %c0_i32 = arith.constant 0 : i32
    %c0_i32_0 = arith.constant 0 : i32
    return %c0_i32, %arg0 : i32, i32
  }
  func.func @transform_1(%arg0: i32) -> (i32, i32) {
    %c0_i32 = arith.constant 0 : i32
    %c0_i32_0 = arith.constant 0 : i32
    return %c0_i32, %arg0 : i32, i32
  }
  func.func @transform_2(%arg0: i32) -> (i32, i32) {
    %c0_i32 = arith.constant 0 : i32
    %c0_i32_0 = arith.constant 0 : i32
    %c0_i32_1 = arith.constant 0 : i32
    return %c0_i32, %c0_i32_0 : i32, i32
  }
  func.func @transform_3(%arg0: i32) -> (i32, i32) {
    %c0_i32 = arith.constant 0 : i32
    %c0_i32_0 = arith.constant 0 : i32
    %c0_i32_1 = arith.constant 0 : i32
    return %c0_i32, %c0_i32_0 : i32, i32
  }
  func.func @transform_4(%arg0: i32) -> (i32, i32) {
    %c0_i32 = arith.constant 0 : i32
    %c0_i32_0 = arith.constant 0 : i32
    %c0_i32_1 = arith.constant 0 : i32
    return %c0_i32, %c0_i32_0 : i32, i32
  }
  func.func @transform_5(%arg0: i32) -> (i32, i32, i32) {
    %c0_i32 = arith.constant 0 : i32
    %c0_i32_0 = arith.constant 0 : i32
    %c0_i32_1 = arith.constant 0 : i32
    %c0_i32_2 = arith.constant 0 : i32
    return %c0_i32, %c0_i32_0, %c0_i32_1 : i32, i32, i32
  }
  func.func @transform_6(%arg0: i32) -> (i32, i32, i32) {
    %c0_i32 = arith.constant 0 : i32
    %c0_i32_0 = arith.constant 0 : i32
    %c0_i32_1 = arith.constant 0 : i32
    %c0_i32_2 = arith.constant 0 : i32
    return %c0_i32, %c0_i32_0, %c0_i32_1 : i32, i32, i32
  }
  func.func @transform_7(%arg0: i32) -> (i32, i32) {
    %c0_i32 = arith.constant 0 : i32
    %c0_i32_0 = arith.constant 0 : i32
    %c0_i32_1 = arith.constant 0 : i32
    return %c0_i32, %c0_i32_0 : i32, i32
  }
  func.func @transform_8(%arg0: i32) -> (i32, i32) {
    %c0_i32 = arith.constant 0 : i32
    %c0_i32_0 = arith.constant 0 : i32
    %c0_i32_1 = arith.constant 0 : i32
    return %c0_i32, %c0_i32_0 : i32, i32
  }
  func.func @transform_9(%arg0: i32) -> (i32, i32) {
    %c0_i32 = arith.constant 0 : i32
    %c0_i32_0 = arith.constant 0 : i32
    return %c0_i32, %arg0 : i32, i32
  }
}

</mosaic_0001>

<llo_original>
// kernel: tpu_custom_call.1
$region0: #{tpu_custom_call.1}
  #allocation0 [shape = 'u32[]', space=smem, size = 0x4, offset = 0x4, fixed_abs, tag = 'smem constant byte address 0x4 - core index']
  #allocation1 [shape = 'u32[72,128]{1,0:T(1,128)}', space=vmem, size = 0x9000, scoped, tag = 'internal scratch']
  #allocation2 [shape = 'f32[1,1]{1,0:T(1,128)S(6)}', space=smem, size = 0x200, scoped, tag = 'scoped memory for tpu_custom_call.1']
  %s0 = inlined_call_operand.vmem [shape: s32[8,128], index: 0, kind: input, shape index: {}]
  %s1 = inlined_call_operand.vmem [shape: f32[1,128], index: 1, kind: input, shape index: {}]
  %s2 = inlined_call_operand.vmem [shape: f32[16,1], index: 2, kind: input, shape index: {}]
  %s3 = inlined_call_operand.vmem [shape: f32[32,32], index: 3, kind: input, shape index: {}]
  %s4 = inlined_call_operand.vmem [shape: f32[32,8], index: 4, kind: input, shape index: {}]
  %s5 = inlined_call_operand.vmem [shape: f32[3,32,32], index: 5, kind: input, shape index: {}]
  %s6 = inlined_call_operand.vmem [shape: f32[4,32,1], index: 6, kind: input, shape index: {}]
  %s7 = inlined_call_operand.vmem [shape: f32[32,1], index: 7, kind: input, shape index: {}]
  %s8 = inlined_call_operand.<no memory space> [shape: f32[1,1], index: 8, kind: input, shape index: {}]
  %s9 = inlined_call_operand.hbm [shape: f32[1,128], index: 9, kind: output, shape index: {}]
  %s10 = sld [smem:[#allocation0]]
  $region46: #{tpu_custom_call.1} parent=0
    _
  %s12 = ssub.s32 1, %s10
  %s13 = scalar_select 0, %s12, %s10
  %14 = sst [smem:[#allocation2]] %s8
  $region1: #{tpu_custom_call.1} parent=0
    #allocation3 [shape = 'u8[512]{0}', space=vmem, size = 0x400, scoped, tag = 'output window, operand 0, single buffered']
    #allocation4 [shape = 's32[1]{0}', space=sflag, size = 0x4, scoped, tag = 'scoped memory for tpu_custom_call.1']
    %15 = vsyncpa [#allocation4], 0
    // Predicated region
    $region2: #{tpu_custom_call.1} parent=1 // pred_check
      _
    $region3: #{tpu_custom_call.1} parent=1 // pred_check_branch
      %17 = sbr.rel (0) target = $region5
    $region4: #{tpu_custom_call.1} parent=1 // pred_region
      _
    $region5: #{tpu_custom_call.1} parent=1 // pred_fallthru
      _
    // Predicated region
    $region6: #{tpu_custom_call.1} parent=1 // pred_check
      _
    $region7: #{tpu_custom_call.1} parent=1 // pred_check_branch
      %19 = sbr.rel (0) target = $region9
    $region8: #{tpu_custom_call.1} parent=1 // pred_region
      _
    $region9: #{tpu_custom_call.1} parent=1 // pred_fallthru
      _
    // Predicated region
    $region10: #{tpu_custom_call.1} parent=1 // pred_check
      _
    $region11: #{tpu_custom_call.1} parent=1 // pred_check_branch
      %21 = sbr.rel (0) target = $region13
    $region12: #{tpu_custom_call.1} parent=1 // pred_region
      _
    $region13: #{tpu_custom_call.1} parent=1 // pred_fallthru
      _
    // Predicated region
    $region14: #{tpu_custom_call.1} parent=1 // pred_check
      _
    $region15: #{tpu_custom_call.1} parent=1 // pred_check_branch
      %23 = sbr.rel (0) target = $region17
    $region16: #{tpu_custom_call.1} parent=1 // pred_region
      _
    $region17: #{tpu_custom_call.1} parent=1 // pred_fallthru
      _
    // Predicated region
    $region18: #{tpu_custom_call.1} parent=1 // pred_check
      _
    $region19: #{tpu_custom_call.1} parent=1 // pred_check_branch
      %25 = sbr.rel (0) target = $region21
    $region20: #{tpu_custom_call.1} parent=1 // pred_region
      _
    $region21: #{tpu_custom_call.1} parent=1 // pred_fallthru
      _
    // Predicated region
    $region22: #{tpu_custom_call.1} parent=1 // pred_check
      _
    $region23: #{tpu_custom_call.1} parent=1 // pred_check_branch
      %27 = sbr.rel (0) target = $region25
    $region24: #{tpu_custom_call.1} parent=1 // pred_region
      _
    $region25: #{tpu_custom_call.1} parent=1 // pred_fallthru
      _
    // Predicated region
    $region26: #{tpu_custom_call.1} parent=1 // pred_check
      _
    $region27: #{tpu_custom_call.1} parent=1 // pred_check_branch
      %29 = sbr.rel (0) target = $region29
    $region28: #{tpu_custom_call.1} parent=1 // pred_region
      _
    $region29: #{tpu_custom_call.1} parent=1 // pred_fallthru
      _
    // Predicated region
    $region30: #{tpu_custom_call.1} parent=1 // pred_check
      _
    $region31: #{tpu_custom_call.1} parent=1 // pred_check_branch
      %31 = sbr.rel (0) target = $region33
    $region32: #{tpu_custom_call.1} parent=1 // pred_region
      _
    $region33: #{tpu_custom_call.1} parent=1 // pred_fallthru
      _
    // Predicated region
    $region34: #{tpu_custom_call.1} parent=1 // pred_check
      _
    $region35: #{tpu_custom_call.1} parent=1 // pred_check_branch
      %33 = sbr.rel (0) target = $region37
    $region36: #{tpu_custom_call.1} parent=1 // pred_region
      _
    $region37: #{tpu_custom_call.1} parent=1 // pred_fallthru
      _
    %v34 = vld [vmem:[%s0] sm:$0xff]
    %v35 = vcvt.s32.f32 %v34
    %v36 = vld [vmem:[%s1] sm:$0x1]
    %v37 = vld [vmem:[%s2] sm:$0xff]
    %v38 = vld [vmem:[%s2 + $0x8] sm:$0xff]
    %40 = vset.pattern.permute.xlu0 0
    %41 = vperm.xlu0 %40, %v37
    %v42 = vpop.permute.xlu0 %41
    %45 = vset.pattern.permute.xlu0 0
    %46 = vperm.xlu0 %45, %v38
    %v47 = vpop.permute.xlu0 %46
    %v50 = vperm.slane %v36, 0
    %v52 = vmul.f32 %v42, %v50
    %v53 = vmul.f32 %v47, %v50
    %v54 = vand.u32 2147483647, %v52
    %vm55 = vcmp.le.f32.partialorder %v54, 0.7853982
    %vm56 = vcmp.lt.s32.totalorder %v52, 0
    %v57 = vand.u32 %v52, 2139095040
    %v58 = vshrl.u32 %v57, 23
    %v59 = vsub.s32 %v58, 127
    %v60 = vand.u32 2147483647, %v52
    %v61 = vand.u32 %v60, 8388607
    %v62 = vor.u32 %v61, 8388608
    %v63 = vsub.s32 0, %v62
    %v64 = vadd.s32 %v59, 1
    %vm65 = vcmp.gt.s32.totalorder %v64, 0
    %v66 = vsel %vm65, %v64, 0
    %v67 = vshrl.u32 %v66, 5
    %v68 = vand.u32 %v66, 31
    %v69 = vsub.s32 32, %v68
    %v70 = vshrl.u32 683565275, %v69
    %v71 = vshll.u32 683565275, %v68
    %v72 = vshrl.u32 2475754826, %v69
    %v73 = vor.u32 %v71, %v72
    %v74 = vshll.u32 2475754826, %v68
    %v75 = vshrl.u32 2131351028, %v69
    %v76 = vor.u32 %v74, %v75
    %v77 = vshll.u32 2131351028, %v68
    %v78 = vshrl.u32 2102212464, %v69
    %v79 = vor.u32 %v77, %v78
    %v80 = vshll.u32 2102212464, %v68
    %v81 = vshrl.u32 920167782, %v69
    %v82 = vor.u32 %v80, %v81
    %v83 = vshll.u32 920167782, %v68
    %v84 = vshrl.u32 1326507024, %v69
    %v85 = vor.u32 %v83, %v84
    %vm86 = vcmp.lt.s32.totalorder %v67, 1
    %vm87 = vcmp.lt.s32.totalorder %v67, 2
    %vm88 = vcmp.lt.s32.totalorder %v67, 3
    %vm89 = vcmp.lt.s32.totalorder %v67, 4
    %v90 = vsel %vm86, %v70, %v73
    %v91 = vsel %vm89, %v79, 2102212464
    %v92 = vsel %vm88, %v76, %v91
    %v93 = vsel %vm87, %v90, %v92
    %v94 = vsel %vm86, %v73, %v76
    %v95 = vsel %vm89, %v82, 920167782
    %v96 = vsel %vm88, %v79, %v95
    %v97 = vsel %vm87, %v94, %v96
    %v98 = vsel %vm86, %v76, %v79
    %v99 = vsel %vm89, %v85, 1326507024
    %v100 = vsel %vm88, %v82, %v99
    %v101 = vsel %vm87, %v98, %v100
    %v102 = vshll.u32 %v62, 8
    %v103 = vand.u32 %v102, 65535
    %v104 = vshrl.u32 %v102, 16
    %v105 = vand.u32 %v101, 65535
    %v106 = vshrl.u32 %v101, 16
    %v107 = vmul.u32 %v103, %v105
    %v108 = vmul.u32 %v103, %v106
    %v109 = vmul.u32 %v104, %v105
    %v110 = vmul.u32 %v104, %v106
    %v111 = vshll.u32 %v108, 16
    %v112 = vshrl.u32 %v108, 16
    %v113 = vshll.u32 %v109, 16
    %v114 = vshrl.u32 %v109, 16
    %vm115 = vc.u32 %v107, %v111
    %v116 = vsel %vm115, 1, 0
    %v117 = vadd.s32 %v107, %v111
    %v118 = vadd.s32 %v110, %v116
    %vm119 = vc.u32 %v117, %v113
    %v120 = vsel %vm119, 1, 0
    %v121 = vadd.s32 %v117, %v113
    %v122 = vadd.s32 %v118, %v120
    %v123 = vadd.s32 %v122, %v112
    %v124 = vadd.s32 %v123, %v114
    %v125 = vand.u32 %v102, 65535
    %v126 = vshrl.u32 %v102, 16
    %v127 = vand.u32 %v97, 65535
    %v128 = vshrl.u32 %v97, 16
    %v129 = vmul.u32 %v125, %v127
    %v130 = vmul.u32 %v125, %v128
    %v131 = vmul.u32 %v126, %v127
    %v132 = vmul.u32 %v126, %v128
    %v133 = vshll.u32 %v130, 16
    %v134 = vshrl.u32 %v130, 16
    %v135 = vshll.u32 %v131, 16
    %v136 = vshrl.u32 %v131, 16
    %vm137 = vc.u32 %v129, %v133
    %v138 = vsel %vm137, 1, 0
    %v139 = vadd.s32 %v129, %v133
    %v140 = vadd.s32 %v132, %v138
    %vm141 = vc.u32 %v139, %v135
    %v142 = vsel %vm141, 1, 0
    %v143 = vadd.s32 %v139, %v135
    %v144 = vadd.s32 %v140, %v142
    %v145 = vadd.s32 %v144, %v134
    %v146 = vadd.s32 %v145, %v136
    %v147 = vmul.u32 %v102, %v93
    %v148 = vadd.s32 %v124, %v143
    %vm149 = vc.u32 %v124, %v143
    %v150 = vadd.s32 %v146, 1
    %v151 = vsel %vm149, %v150, %v146
    %v152 = vadd.s32 %v147, %v151
    %v153 = vadd.s32 %v152, 536870912
    %v154 = vshrl.u32 %v153, 30
    %v155 = vshll.u32 %v154, 30
    %v156 = vsub.s32 %v152, %v155
    %vm157 = vcmp.lt.s32.totalorder %v156, 0
    %v158 = vsub.s32 0, %v156
    %v159 = vsel %vm157, %v158, %v156
    %v160 = vclz %v159
    %v161 = vsub.s32 %v160, 2
    %vm162 = vcmp.gt.s32.totalorder 0, %v161
    %v163 = vsel %vm162, 0, %v161
    %v164 = vsub.s32 32, %v163
    %v165 = vshll.u32 %v156, %v163
    %v166 = vshrl.u32 %v148, %v164
    %v167 = vor.u32 %v165, %v166
    %v168 = vsub.s32 4294967266, %v163
    %v169 = vadd.s32 %v168, 127
    %v170 = vshll.u32 %v169, 23
    %v171 = vor.u32 4788187, %v170
    %v172 = vand.u32 2147483647, %v171
    %v174 = vcvt.s32.f32 %v167
    %v175 = vmul.f32 %v174, %v172
    %v176 = vxor.u32 %v175, 2147483648
    %v177 = vsel %vm56, %v176, %v175
    %v178 = vsub.s32 4, %v154
    %v179 = vsel %vm56, %v178, %v154
    %v180 = vsel %vm55, %v52, %v177
    %v181 = vsel %vm55, 0, %v179
    %v182 = vmul.f32 %v180, %v180
    %v183 = vmul.f32 %v182, -0.001358992
    %v184 = vadd.f32 %v183, 0.041655596
    %v185 = vmul.f32 %v182, %v184
    %v186 = vadd.f32 %v185, -0.4999988
    %v187 = vmul.f32 %v182, %v186
    %v188 = vadd.f32 1.0, %v187
    %v189 = vmul.f32 %v180, %v180
    %v190 = vmul.f32 %v189, -0.00019511016
    %v191 = vadd.f32 %v190, 0.008332121
    %v192 = vmul.f32 %v189, %v191
    %v193 = vadd.f32 %v192, -0.16666654
    %v194 = vmul.f32 %v189, %v193
    %v195 = vadd.f32 %v194, 1.0
    %v196 = vmul.f32 %v195, %v180
    %vm197 = vweird.f32 %v52
    %v198 = vadd.s32 %v181, 3
    %v199 = vand.u32 %v198, 3
    %vm200 = vcmp.lt.s32.totalorder %v199, 2
    %vm201 = vcmp.eq.s32.totalorder %v199, 0
    %v202 = vxor.u32 %v196, 2147483648
    %v203 = vsel %vm201, %v188, %v202
    %vm204 = vcmp.eq.s32.totalorder %v199, 2
    %v205 = vxor.u32 %v188, 2147483648
    %v206 = vsel %vm204, %v205, %v196
    %v207 = vsel %vm200, %v203, %v206
    %v208 = vsel %vm197, nan, %v207
    %v209 = vand.u32 2147483647, %v53
    %vm210 = vcmp.le.f32.partialorder %v209, 0.7853982
    %vm211 = vcmp.lt.s32.totalorder %v53, 0
    %v212 = vand.u32 %v53, 2139095040
    %v213 = vshrl.u32 %v212, 23
    %v214 = vsub.s32 %v213, 127
    %v215 = vand.u32 2147483647, %v53
    %v216 = vand.u32 %v215, 8388607
    %v217 = vor.u32 %v216, 8388608
    %v218 = vsub.s32 0, %v217
    %v219 = vadd.s32 %v214, 1
    %vm220 = vcmp.gt.s32.totalorder %v219, 0
    %v221 = vsel %vm220, %v219, 0
    %v222 = vshrl.u32 %v221, 5
    %v223 = vand.u32 %v221, 31
    %v224 = vsub.s32 32, %v223
    %v225 = vshrl.u32 683565275, %v224
    %v226 = vshll.u32 683565275, %v223
    %v227 = vshrl.u32 2475754826, %v224
    %v228 = vor.u32 %v226, %v227
    %v229 = vshll.u32 2475754826, %v223
    %v230 = vshrl.u32 2131351028, %v224
    %v231 = vor.u32 %v229, %v230
    %v232 = vshll.u32 2131351028, %v223
    %v233 = vshrl.u32 2102212464, %v224
    %v234 = vor.u32 %v232, %v233
    %v235 = vshll.u32 2102212464, %v223
    %v236 = vshrl.u32 920167782, %v224
    %v237 = vor.u32 %v235, %v236
    %v238 = vshll.u32 920167782, %v223
    %v239 = vshrl.u32 1326507024, %v224
    %v240 = vor.u32 %v238, %v239
    %vm241 = vcmp.lt.s32.totalorder %v222, 1
    %vm242 = vcmp.lt.s32.totalorder %v222, 2
    %vm243 = vcmp.lt.s32.totalorder %v222, 3
    %vm244 = vcmp.lt.s32.totalorder %v222, 4
    %v245 = vsel %vm241, %v225, %v228
    %v246 = vsel %vm244, %v234, 2102212464
    %v247 = vsel %vm243, %v231, %v246
    %v248 = vsel %vm242, %v245, %v247
    %v249 = vsel %vm241, %v228, %v231
    %v250 = vsel %vm244, %v237, 920167782
    %v251 = vsel %vm243, %v234, %v250
    %v252 = vsel %vm242, %v249, %v251
    %v253 = vsel %vm241, %v231, %v234
    %v254 = vsel %vm244, %v240, 1326507024
    %v255 = vsel %vm243, %v237, %v254
    %v256 = vsel %vm242, %v253, %v255
    %v257 = vshll.u32 %v217, 8
    %v258 = vand.u32 %v257, 65535
    %v259 = vshrl.u32 %v257, 16
    %v260 = vand.u32 %v256, 65535
    %v261 = vshrl.u32 %v256, 16
    %v262 = vmul.u32 %v258, %v260
    %v263 = vmul.u32 %v258, %v261
    %v264 = vmul.u32 %v259, %v260
    %v265 = vmul.u32 %v259, %v261
    %v266 = vshll.u32 %v263, 16
    %v267 = vshrl.u32 %v263, 16
    %v268 = vshll.u32 %v264, 16
    %v269 = vshrl.u32 %v264, 16
    %vm270 = vc.u32 %v262, %v266
    %v271 = vsel %vm270, 1, 0
    %v272 = vadd.s32 %v262, %v266
    %v273 = vadd.s32 %v265, %v271
    %vm274 = vc.u32 %v272, %v268
    %v275 = vsel %vm274, 1, 0
    %v276 = vadd.s32 %v272, %v268
    %v277 = vadd.s32 %v273, %v275
    %v278 = vadd.s32 %v277, %v267
    %v279 = vadd.s32 %v278, %v269
    %v280 = vand.u32 %v257, 65535
    %v281 = vshrl.u32 %v257, 16
    %v282 = vand.u32 %v252, 65535
    %v283 = vshrl.u32 %v252, 16
    %v284 = vmul.u32 %v280, %v282
    %v285 = vmul.u32 %v280, %v283
    %v286 = vmul.u32 %v281, %v282
    %v287 = vmul.u32 %v281, %v283
    %v288 = vshll.u32 %v285, 16
    %v289 = vshrl.u32 %v285, 16
    %v290 = vshll.u32 %v286, 16
    %v291 = vshrl.u32 %v286, 16
    %vm292 = vc.u32 %v284, %v288
    %v293 = vsel %vm292, 1, 0
    %v294 = vadd.s32 %v284, %v288
    %v295 = vadd.s32 %v287, %v293
    %vm296 = vc.u32 %v294, %v290
    %v297 = vsel %vm296, 1, 0
    %v298 = vadd.s32 %v294, %v290
    %v299 = vadd.s32 %v295, %v297
    %v300 = vadd.s32 %v299, %v289
    %v301 = vadd.s32 %v300, %v291
    %v302 = vmul.u32 %v257, %v248
    %v303 = vadd.s32 %v279, %v298
    %vm304 = vc.u32 %v279, %v298
    %v305 = vadd.s32 %v301, 1
    %v306 = vsel %vm304, %v305, %v301
    %v307 = vadd.s32 %v302, %v306
    %v308 = vadd.s32 %v307, 536870912
    %v309 = vshrl.u32 %v308, 30
    %v310 = vshll.u32 %v309, 30
    %v311 = vsub.s32 %v307, %v310
    %vm312 = vcmp.lt.s32.totalorder %v311, 0
    %v313 = vsub.s32 0, %v311
    %v314 = vsel %vm312, %v313, %v311
    %v315 = vclz %v314
    %v316 = vsub.s32 %v315, 2
    %vm317 = vcmp.gt.s32.totalorder 0, %v316
    %v318 = vsel %vm317, 0, %v316
    %v319 = vsub.s32 32, %v318
    %v320 = vshll.u32 %v311, %v318
    %v321 = vshrl.u32 %v303, %v319
    %v322 = vor.u32 %v320, %v321
    %v323 = vsub.s32 4294967266, %v318
    %v324 = vadd.s32 %v323, 127
    %v325 = vshll.u32 %v324, 23
    %v326 = vor.u32 4788187, %v325
    %v327 = vand.u32 2147483647, %v326
    %v329 = vcvt.s32.f32 %v322
    %v330 = vmul.f32 %v329, %v327
    %v331 = vxor.u32 %v330, 2147483648
    %v332 = vsel %vm211, %v331, %v330
    %v333 = vsub.s32 4, %v309
    %v334 = vsel %vm211, %v333, %v309
    %v335 = vsel %vm210, %v53, %v332
    %v336 = vsel %vm210, 0, %v334
    %v337 = vmul.f32 %v335, %v335
    %v338 = vmul.f32 %v337, -0.001358992
    %v339 = vadd.f32 %v338, 0.041655596
    %v340 = vmul.f32 %v337, %v339
    %v341 = vadd.f32 %v340, -0.4999988
    %v342 = vmul.f32 %v337, %v341
    %v343 = vadd.f32 1.0, %v342
    %v344 = vmul.f32 %v335, %v335
    %v345 = vmul.f32 %v344, -0.00019511016
    %v346 = vadd.f32 %v345, 0.008332121
    %v347 = vmul.f32 %v344, %v346
    %v348 = vadd.f32 %v347, -0.16666654
    %v349 = vmul.f32 %v344, %v348
    %v350 = vadd.f32 %v349, 1.0
    %v351 = vmul.f32 %v350, %v335
    %vm352 = vweird.f32 %v53
    %v353 = vadd.s32 %v336, 3
    %v354 = vand.u32 %v353, 3
    %vm355 = vcmp.lt.s32.totalorder %v354, 2
    %vm356 = vcmp.eq.s32.totalorder %v354, 0
    %v357 = vxor.u32 %v351, 2147483648
    %v358 = vsel %vm356, %v343, %v357
    %vm359 = vcmp.eq.s32.totalorder %v354, 2
    %v360 = vxor.u32 %v343, 2147483648
    %v361 = vsel %vm359, %v360, %v351
    %v362 = vsel %vm355, %v358, %v361
    %v363 = vsel %vm352, nan, %v362
    %v364 = vand.u32 2147483647, %v52
    %vm365 = vcmp.le.f32.partialorder %v364, 0.7853982
    %vm366 = vcmp.lt.s32.totalorder %v52, 0
    %v367 = vand.u32 %v52, 2139095040
    %v368 = vshrl.u32 %v367, 23
    %v369 = vsub.s32 %v368, 127
    %v370 = vand.u32 2147483647, %v52
    %v371 = vand.u32 %v370, 8388607
    %v372 = vor.u32 %v371, 8388608
    %v373 = vsub.s32 0, %v372
    %v374 = vadd.s32 %v369, 1
    %vm375 = vcmp.gt.s32.totalorder %v374, 0
    %v376 = vsel %vm375, %v374, 0
    %v377 = vshrl.u32 %v376, 5
    %v378 = vand.u32 %v376, 31
    %v379 = vsub.s32 32, %v378
    %v380 = vshrl.u32 683565275, %v379
    %v381 = vshll.u32 683565275, %v378
    %v382 = vshrl.u32 2475754826, %v379
    %v383 = vor.u32 %v381, %v382
    %v384 = vshll.u32 2475754826, %v378
    %v385 = vshrl.u32 2131351028, %v379
    %v386 = vor.u32 %v384, %v385
    %v387 = vshll.u32 2131351028, %v378
    %v388 = vshrl.u32 2102212464, %v379
    %v389 = vor.u32 %v387, %v388
    %v390 = vshll.u32 2102212464, %v378
    %v391 = vshrl.u32 920167782, %v379
    %v392 = vor.u32 %v390, %v391
    %v393 = vshll.u32 920167782, %v378
    %v394 = vshrl.u32 1326507024, %v379
    %v395 = vor.u32 %v393, %v394
    %vm396 = vcmp.lt.s32.totalorder %v377, 1
    %vm397 = vcmp.lt.s32.totalorder %v377, 2
    %vm398 = vcmp.lt.s32.totalorder %v377, 3
    %vm399 = vcmp.lt.s32.totalorder %v377, 4
    %v400 = vsel %vm396, %v380, %v383
    %v401 = vsel %vm399, %v389, 2102212464
    %v402 = vsel %vm398, %v386, %v401
    %v403 = vsel %vm397, %v400, %v402
    %v404 = vsel %vm396, %v383, %v386
    %v405 = vsel %vm399, %v392, 920167782
    %v406 = vsel %vm398, %v389, %v405
    %v407 = vsel %vm397, %v404, %v406
    %v408 = vsel %vm396, %v386, %v389
    %v409 = vsel %vm399, %v395, 1326507024
    %v410 = vsel %vm398, %v392, %v409
    %v411 = vsel %vm397, %v408, %v410
    %v412 = vshll.u32 %v372, 8
    %v413 = vand.u32 %v412, 65535
    %v414 = vshrl.u32 %v412, 16
    %v415 = vand.u32 %v411, 65535
    %v416 = vshrl.u32 %v411, 16
    %v417 = vmul.u32 %v413, %v415
    %v418 = vmul.u32 %v413, %v416
    %v419 = vmul.u32 %v414, %v415
    %v420 = vmul.u32 %v414, %v416
    %v421 = vshll.u32 %v418, 16
    %v422 = vshrl.u32 %v418, 16
    %v423 = vshll.u32 %v419, 16
    %v424 = vshrl.u32 %v419, 16
    %vm425 = vc.u32 %v417, %v421
    %v426 = vsel %vm425, 1, 0
    %v427 = vadd.s32 %v417, %v421
    %v428 = vadd.s32 %v420, %v426
    %vm429 = vc.u32 %v427, %v423
    %v430 = vsel %vm429, 1, 0
    %v431 = vadd.s32 %v427, %v423
    %v432 = vadd.s32 %v428, %v430
    %v433 = vadd.s32 %v432, %v422
    %v434 = vadd.s32 %v433, %v424
    %v435 = vand.u32 %v412, 65535
    %v436 = vshrl.u32 %v412, 16
    %v437 = vand.u32 %v407, 65535
    %v438 = vshrl.u32 %v407, 16
    %v439 = vmul.u32 %v435, %v437
    %v440 = vmul.u32 %v435, %v438
    %v441 = vmul.u32 %v436, %v437
    %v442 = vmul.u32 %v436, %v438
    %v443 = vshll.u32 %v440, 16
    %v444 = vshrl.u32 %v440, 16
    %v445 = vshll.u32 %v441, 16
    %v446 = vshrl.u32 %v441, 16
    %vm447 = vc.u32 %v439, %v443
    %v448 = vsel %vm447, 1, 0
    %v449 = vadd.s32 %v439, %v443
    %v450 = vadd.s32 %v442, %v448
    %vm451 = vc.u32 %v449, %v445
    %v452 = vsel %vm451, 1, 0
    %v453 = vadd.s32 %v449, %v445
    %v454 = vadd.s32 %v450, %v452
    %v455 = vadd.s32 %v454, %v444
    %v456 = vadd.s32 %v455, %v446
    %v457 = vmul.u32 %v412, %v403
    %v458 = vadd.s32 %v434, %v453
    %vm459 = vc.u32 %v434, %v453
    %v460 = vadd.s32 %v456, 1
    %v461 = vsel %vm459, %v460, %v456
    %v462 = vadd.s32 %v457, %v461
    %v463 = vadd.s32 %v462, 536870912
    %v464 = vshrl.u32 %v463, 30
    %v465 = vshll.u32 %v464, 30
    %v466 = vsub.s32 %v462, %v465
    %vm467 = vcmp.lt.s32.totalorder %v466, 0
    %v468 = vsub.s32 0, %v466
    %v469 = vsel %vm467, %v468, %v466
    %v470 = vclz %v469
    %v471 = vsub.s32 %v470, 2
    %vm472 = vcmp.gt.s32.totalorder 0, %v471
    %v473 = vsel %vm472, 0, %v471
    %v474 = vsub.s32 32, %v473
    %v475 = vshll.u32 %v466, %v473
    %v476 = vshrl.u32 %v458, %v474
    %v477 = vor.u32 %v475, %v476
    %v478 = vsub.s32 4294967266, %v473
    %v479 = vadd.s32 %v478, 127
    %v480 = vshll.u32 %v479, 23
    %v481 = vor.u32 4788187, %v480
    %v482 = vand.u32 2147483647, %v481
    %v484 = vcvt.s32.f32 %v477
    %v485 = vmul.f32 %v484, %v482
    %v486 = vxor.u32 %v485, 2147483648
    %v487 = vsel %vm366, %v486, %v485
    %v488 = vsub.s32 4, %v464
    %v489 = vsel %vm366, %v488, %v464
    %v490 = vsel %vm365, %v52, %v487
    %v491 = vsel %vm365, 0, %v489
    %v492 = vmul.f32 %v490, %v490
    %v493 = vmul.f32 %v492, -0.001358992
    %v494 = vadd.f32 %v493, 0.041655596
    %v495 = vmul.f32 %v492, %v494
    %v496 = vadd.f32 %v495, -0.4999988
    %v497 = vmul.f32 %v492, %v496
    %v498 = vadd.f32 1.0, %v497
    %v499 = vmul.f32 %v490, %v490
    %v500 = vmul.f32 %v499, -0.00019511016
    %v501 = vadd.f32 %v500, 0.008332121
    %v502 = vmul.f32 %v499, %v501
    %v503 = vadd.f32 %v502, -0.16666654
    %v504 = vmul.f32 %v499, %v503
    %v505 = vadd.f32 %v504, 1.0
    %v506 = vmul.f32 %v505, %v490
    %vm507 = vweird.f32 %v52
    %v508 = vand.u32 %v491, 3
    %vm509 = vcmp.lt.s32.totalorder %v508, 2
    %vm510 = vcmp.eq.s32.totalorder %v508, 0
    %v511 = vxor.u32 %v506, 2147483648
    %v512 = vsel %vm510, %v498, %v511
    %vm513 = vcmp.eq.s32.totalorder %v508, 2
    %v514 = vxor.u32 %v498, 2147483648
    %v515 = vsel %vm513, %v514, %v506
    %v516 = vsel %vm509, %v512, %v515
    %v517 = vsel %vm507, nan, %v516
    %v518 = vand.u32 2147483647, %v53
    %vm519 = vcmp.le.f32.partialorder %v518, 0.7853982
    %vm520 = vcmp.lt.s32.totalorder %v53, 0
    %v521 = vand.u32 %v53, 2139095040
    %v522 = vshrl.u32 %v521, 23
    %v523 = vsub.s32 %v522, 127
    %v524 = vand.u32 2147483647, %v53
    %v525 = vand.u32 %v524, 8388607
    %v526 = vor.u32 %v525, 8388608
    %v527 = vsub.s32 0, %v526
    %v528 = vadd.s32 %v523, 1
    %vm529 = vcmp.gt.s32.totalorder %v528, 0
    %v530 = vsel %vm529, %v528, 0
    %v531 = vshrl.u32 %v530, 5
    %v532 = vand.u32 %v530, 31
    %v533 = vsub.s32 32, %v532
    %v534 = vshrl.u32 683565275, %v533
    %v535 = vshll.u32 683565275, %v532
    %v536 = vshrl.u32 2475754826, %v533
    %v537 = vor.u32 %v535, %v536
    %v538 = vshll.u32 2475754826, %v532
    %v539 = vshrl.u32 2131351028, %v533
    %v540 = vor.u32 %v538, %v539
    %v541 = vshll.u32 2131351028, %v532
    %v542 = vshrl.u32 2102212464, %v533
    %v543 = vor.u32 %v541, %v542
    %v544 = vshll.u32 2102212464, %v532
    %v545 = vshrl.u32 920167782, %v533
    %v546 = vor.u32 %v544, %v545
    %v547 = vshll.u32 920167782, %v532
    %v548 = vshrl.u32 1326507024, %v533
    %v549 = vor.u32 %v547, %v548
    %vm550 = vcmp.lt.s32.totalorder %v531, 1
    %vm551 = vcmp.lt.s32.totalorder %v531, 2
    %vm552 = vcmp.lt.s32.totalorder %v531, 3
    %vm553 = vcmp.lt.s32.totalorder %v531, 4
    %v554 = vsel %vm550, %v534, %v537
    %v555 = vsel %vm553, %v543, 2102212464
    %v556 = vsel %vm552, %v540, %v555
    %v557 = vsel %vm551, %v554, %v556
    %v558 = vsel %vm550, %v537, %v540
    %v559 = vsel %vm553, %v546, 920167782
    %v560 = vsel %vm552, %v543, %v559
    %v561 = vsel %vm551, %v558, %v560
    %v562 = vsel %vm550, %v540, %v543
    %v563 = vsel %vm553, %v549, 1326507024
    %v564 = vsel %vm552, %v546, %v563
    %v565 = vsel %vm551, %v562, %v564
    %v566 = vshll.u32 %v526, 8
    %v567 = vand.u32 %v566, 65535
    %v568 = vshrl.u32 %v566, 16
    %v569 = vand.u32 %v565, 65535
    %v570 = vshrl.u32 %v565, 16
    %v571 = vmul.u32 %v567, %v569
    %v572 = vmul.u32 %v567, %v570
    %v573 = vmul.u32 %v568, %v569
    %v574 = vmul.u32 %v568, %v570
    %v575 = vshll.u32 %v572, 16
    %v576 = vshrl.u32 %v572, 16
    %v577 = vshll.u32 %v573, 16
    %v578 = vshrl.u32 %v573, 16
    %vm579 = vc.u32 %v571, %v575
    %v580 = vsel %vm579, 1, 0
    %v581 = vadd.s32 %v571, %v575
    %v582 = vadd.s32 %v574, %v580
    %vm583 = vc.u32 %v581, %v577
    %v584 = vsel %vm583, 1, 0
    %v585 = vadd.s32 %v581, %v577
    %v586 = vadd.s32 %v582, %v584
    %v587 = vadd.s32 %v586, %v576
    %v588 = vadd.s32 %v587, %v578
    %v589 = vand.u32 %v566, 65535
    %v590 = vshrl.u32 %v566, 16
    %v591 = vand.u32 %v561, 65535
    %v592 = vshrl.u32 %v561, 16
    %v593 = vmul.u32 %v589, %v591
    %v594 = vmul.u32 %v589, %v592
    %v595 = vmul.u32 %v590, %v591
    %v596 = vmul.u32 %v590, %v592
    %v597 = vshll.u32 %v594, 16
    %v598 = vshrl.u32 %v594, 16
    %v599 = vshll.u32 %v595, 16
    %v600 = vshrl.u32 %v595, 16
    %vm601 = vc.u32 %v593, %v597
    %v602 = vsel %vm601, 1, 0
    %v603 = vadd.s32 %v593, %v597
    %v604 = vadd.s32 %v596, %v602
    %vm605 = vc.u32 %v603, %v599
    %v606 = vsel %vm605, 1, 0
    %v607 = vadd.s32 %v603, %v599
    %v608 = vadd.s32 %v604, %v606
    %v609 = vadd.s32 %v608, %v598
    %v610 = vadd.s32 %v609, %v600
    %v611 = vmul.u32 %v566, %v557
    %v612 = vadd.s32 %v588, %v607
    %vm613 = vc.u32 %v588, %v607
    %v614 = vadd.s32 %v610, 1
    %v615 = vsel %vm613, %v614, %v610
    %v616 = vadd.s32 %v611, %v615
    %v617 = vadd.s32 %v616, 536870912
    %v618 = vshrl.u32 %v617, 30
    %v619 = vshll.u32 %v618, 30
    %v620 = vsub.s32 %v616, %v619
    %vm621 = vcmp.lt.s32.totalorder %v620, 0
    %v622 = vsub.s32 0, %v620
    %v623 = vsel %vm621, %v622, %v620
    %v624 = vclz %v623
    %v625 = vsub.s32 %v624, 2
    %vm626 = vcmp.gt.s32.totalorder 0, %v625
    %v627 = vsel %vm626, 0, %v625
    %v628 = vsub.s32 32, %v627
    %v629 = vshll.u32 %v620, %v627
    %v630 = vshrl.u32 %v612, %v628
    %v631 = vor.u32 %v629, %v630
    %v632 = vsub.s32 4294967266, %v627
    %v633 = vadd.s32 %v632, 127
    %v634 = vshll.u32 %v633, 23
    %v635 = vor.u32 4788187, %v634
    %v636 = vand.u32 2147483647, %v635
    %v638 = vcvt.s32.f32 %v631
    %v639 = vmul.f32 %v638, %v636
    %v640 = vxor.u32 %v639, 2147483648
    %v641 = vsel %vm520, %v640, %v639
    %v642 = vsub.s32 4, %v618
    %v643 = vsel %vm520, %v642, %v618
    %v644 = vsel %vm519, %v53, %v641
    %v645 = vsel %vm519, 0, %v643
    %v646 = vmul.f32 %v644, %v644
    %v647 = vmul.f32 %v646, -0.001358992
    %v648 = vadd.f32 %v647, 0.041655596
    %v649 = vmul.f32 %v646, %v648
    %v650 = vadd.f32 %v649, -0.4999988
    %v651 = vmul.f32 %v646, %v650
    %v652 = vadd.f32 1.0, %v651
    %v653 = vmul.f32 %v644, %v644
    %v654 = vmul.f32 %v653, -0.00019511016
    %v655 = vadd.f32 %v654, 0.008332121
    %v656 = vmul.f32 %v653, %v655
    %v657 = vadd.f32 %v656, -0.16666654
    %v658 = vmul.f32 %v653, %v657
    %v659 = vadd.f32 %v658, 1.0
    %v660 = vmul.f32 %v659, %v644
    %vm661 = vweird.f32 %v53
    %v662 = vand.u32 %v645, 3
    %vm663 = vcmp.lt.s32.totalorder %v662, 2
    %vm664 = vcmp.eq.s32.totalorder %v662, 0
    %v665 = vxor.u32 %v660, 2147483648
    %v666 = vsel %vm664, %v652, %v665
    %vm667 = vcmp.eq.s32.totalorder %v662, 2
    %v668 = vxor.u32 %v652, 2147483648
    %v669 = vsel %vm667, %v668, %v660
    %v670 = vsel %vm663, %v666, %v669
    %v671 = vsel %vm661, nan, %v670
    %v672 = vld [vmem:[%s3] sm:$0xff]
    %v673 = vld [vmem:[%s3 + $0x8] sm:$0xff]
    %v674 = vld [vmem:[%s3 + $0x10] sm:$0xff]
    %v675 = vld [vmem:[%s3 + $0x18] sm:$0xff]
    %v676 = vld [vmem:[%s6] sm:$0xff]
    %v677 = vld [vmem:[%s6 + $0x8] sm:$0xff]
    %v678 = vld [vmem:[%s6 + $0x10] sm:$0xff]
    %v679 = vld [vmem:[%s6 + $0x18] sm:$0xff]
    %681 = vset.pattern.permute.xlu0 0
    %682 = vperm.xlu0 %681, %v676
    %v683 = vpop.permute.xlu0 %682
    %686 = vset.pattern.permute.xlu0 0
    %687 = vperm.xlu0 %686, %v677
    %v688 = vpop.permute.xlu0 %687
    %691 = vset.pattern.permute.xlu0 0
    %692 = vperm.xlu0 %691, %v678
    %v693 = vpop.permute.xlu0 %692
    %696 = vset.pattern.permute.xlu0 0
    %697 = vperm.xlu0 %696, %v679
    %v698 = vpop.permute.xlu0 %697
    %vm700 = vcmask 261120
    %v702 = vsel %vm700, %v672, 0
    %v705 = vsel %vm700, %v673, 0
    %v708 = vsel %vm700, %v674, 0
    %v711 = vsel %vm700, %v675, 0
    %713 = vmatpush.msra.mxu0 0.0
    %714 = vmatpush.msra.mxu0 0.0
    %715 = vmatpush.msra.mxu0 0.0
    %716 = vmatpush.msra.mxu0 0.0
    %717 = vmatpush.msra.mxu0 0.0
    %718 = vmatpush.msra.mxu0 0.0
    %719 = vmatpush.msra.mxu0 0.0
    %720 = vmatpush.msra.mxu0 0.0
    %721 = vmatpush.msra.mxu0 0.0
    %722 = vmatpush.msra.mxu0 0.0
    %723 = vmatpush.msra.mxu0 0.0
    %724 = vmatpush.msra.mxu0 0.0
    %725 = vmatpush.msra.mxu0 %v671
    %726 = vmatpush.msra.mxu0 %v517
    %727 = vmatpush.msra.mxu0 %v363
    %728 = vmatpush.msra.mxu0 %v208
    %729 = vmatmul.f32.gmra.mxu0 %v702
    %v730 = vpop.f32.mrf.mxu0
    %v731 = vadd.f32 %v683, %v730
    %732 = vmatmul.f32.gmra.mxu0 %v705
    %v733 = vpop.f32.mrf.mxu0
    %v734 = vadd.f32 %v688, %v733
    %735 = vmatmul.f32.gmra.mxu0 %v708
    %v736 = vpop.f32.mrf.mxu0
    %v737 = vadd.f32 %v693, %v736
    %738 = vmatmul.f32.gmra.mxu0 %v711
    %v739 = vpop.f32.mrf.mxu0
    %v740 = vadd.f32 %v698, %v739
    %741 = vdwg.mxu0
    %v742 = vmul.f32 %v731, %v731
    %v743 = vmul.f32 %v734, %v734
    %v744 = vmul.f32 %v737, %v737
    %v745 = vmul.f32 %v740, %v740
    %v746 = vmul.f32 %v731, %v742
    %v747 = vmul.f32 %v734, %v743
    %v748 = vmul.f32 %v737, %v744
    %v749 = vmul.f32 %v740, %v745
    %v750 = vmul.f32 %v746, 0.044715
    %v751 = vmul.f32 %v747, 0.044715
    %v752 = vmul.f32 %v748, 0.044715
    %v753 = vmul.f32 %v749, 0.044715
    %v754 = vadd.f32 %v731, %v750
    %v755 = vadd.f32 %v734, %v751
    %v756 = vadd.f32 %v737, %v752
    %v757 = vadd.f32 %v740, %v753
    %v758 = vmul.f32 %v754, 0.7978846
    %v759 = vmul.f32 %v755, 0.7978846
    %v760 = vmul.f32 %v756, 0.7978846
    %v761 = vmul.f32 %v757, 0.7978846
    %v762 = vtanh.pop %v758
    %v763 = vtanh.pop %v759
    %v764 = vtanh.pop %v760
    %v765 = vtanh.pop %v761
    %v766 = vadd.f32 %v762, 1.0
    %v767 = vadd.f32 %v763, 1.0
    %v768 = vadd.f32 %v764, 1.0
    %v769 = vadd.f32 %v765, 1.0
    %v770 = vmul.f32 %v766, 0.5
    %v771 = vmul.f32 %v767, 0.5
    %v772 = vmul.f32 %v768, 0.5
    %v773 = vmul.f32 %v769, 0.5
    %v774 = vmul.f32 %v731, %v770
    %v775 = vmul.f32 %v734, %v771
    %v776 = vmul.f32 %v737, %v772
    %v777 = vmul.f32 %v740, %v773
    %v778 = vld [vmem:[%s5] sm:$0xff]
    %v779 = vld [vmem:[%s5 + $0x8] sm:$0xff]
    %v780 = vld [vmem:[%s5 + $0x10] sm:$0xff]
    %v781 = vld [vmem:[%s5 + $0x18] sm:$0xff]
    %v782 = vld [vmem:[%s4] sm:$0xff]
    %v783 = vld [vmem:[%s4 + $0x8] sm:$0xff]
    %v784 = vld [vmem:[%s4 + $0x10] sm:$0xff]
    %v785 = vld [vmem:[%s4 + $0x18] sm:$0xff]
    %vm786 = vcmask 64512
    %v788 = vsel %vm786, %v782, 0
    %v791 = vsel %vm786, %v783, 0
    %v794 = vsel %vm786, %v784, 0
    %v797 = vsel %vm786, %v785, 0
    %799 = vmatpush.msra.mxu0 0.0
    %800 = vmatpush.msra.mxu0 0.0
    %801 = vmatpush.msra.mxu0 0.0
    %802 = vmatpush.msra.mxu0 0.0
    %803 = vmatpush.msra.mxu0 0.0
    %804 = vmatpush.msra.mxu0 0.0
    %805 = vmatpush.msra.mxu0 0.0
    %806 = vmatpush.msra.mxu0 0.0
    %807 = vmatpush.msra.mxu0 0.0
    %808 = vmatpush.msra.mxu0 0.0
    %809 = vmatpush.msra.mxu0 0.0
    %810 = vmatpush.msra.mxu0 0.0
    %811 = vmatpush.msra.mxu0 0.0
    %812 = vmatpush.msra.mxu0 0.0
    %813 = vmatpush.msra.mxu0 0.0
    %814 = vmatpush.msra.mxu0 %v35
    %815 = vmatmul.f32.gmra.mxu0 %v788
    %v816 = vpop.f32.mrf.mxu0
    %v817 = vadd.f32 0.0, %v816
    %818 = vmatmul.f32.gmra.mxu0 %v791
    %v819 = vpop.f32.mrf.mxu0
    %v820 = vadd.f32 0.0, %v819
    %821 = vmatmul.f32.gmra.mxu0 %v794
    %v822 = vpop.f32.mrf.mxu0
    %v823 = vadd.f32 0.0, %v822
    %824 = vmatmul.f32.gmra.mxu0 %v797
    %v825 = vpop.f32.mrf.mxu0
    %v826 = vadd.f32 0.0, %v825
    %827 = vdwg.mxu0
    %v829 = vsel %vm700, %v778, 0
    %v832 = vsel %vm700, %v779, 0
    %v835 = vsel %vm700, %v780, 0
    %v838 = vsel %vm700, %v781, 0
    %840 = vmatpush.msra.mxu0 0.0
    %841 = vmatpush.msra.mxu0 0.0
    %842 = vmatpush.msra.mxu0 0.0
    %843 = vmatpush.msra.mxu0 0.0
    %844 = vmatpush.msra.mxu0 0.0
    %845 = vmatpush.msra.mxu0 0.0
    %846 = vmatpush.msra.mxu0 0.0
    %847 = vmatpush.msra.mxu0 0.0
    %848 = vmatpush.msra.mxu0 0.0
    %849 = vmatpush.msra.mxu0 0.0
    %850 = vmatpush.msra.mxu0 0.0
    %851 = vmatpush.msra.mxu0 0.0
    %852 = vmatpush.msra.mxu0 %v777
    %853 = vmatpush.msra.mxu0 %v776
    %854 = vmatpush.msra.mxu0 %v775
    %855 = vmatpush.msra.mxu0 %v774
    %856 = vmatmul.f32.gmra.mxu0 %v829
    %v857 = vpop.f32.mrf.mxu0
    %v858 = vadd.f32 %v817, %v857
    %859 = vmatmul.f32.gmra.mxu0 %v832
    %v860 = vpop.f32.mrf.mxu0
    %v861 = vadd.f32 %v820, %v860
    %862 = vmatmul.f32.gmra.mxu0 %v835
    %v863 = vpop.f32.mrf.mxu0
    %v864 = vadd.f32 %v823, %v863
    %865 = vmatmul.f32.gmra.mxu0 %v838
    %v866 = vpop.f32.mrf.mxu0
    %v867 = vadd.f32 %v826, %v866
    %868 = vdwg.mxu0
    %s869 = scalar_lea.vmem %s6, 32
    %v870 = vld [vmem:[%s869] sm:$0xff]
    %v871 = vld [vmem:[%s869 + $0x8] sm:$0xff]
    %v872 = vld [vmem:[%s869 + $0x10] sm:$0xff]
    %v873 = vld [vmem:[%s869 + $0x18] sm:$0xff]
    %875 = vset.pattern.permute.xlu0 0
    %876 = vperm.xlu0 %875, %v870
    %v877 = vpop.permute.xlu0 %876
    %880 = vset.pattern.permute.xlu0 0
    %881 = vperm.xlu0 %880, %v871
    %v882 = vpop.permute.xlu0 %881
    %885 = vset.pattern.permute.xlu0 0
    %886 = vperm.xlu0 %885, %v872
    %v887 = vpop.permute.xlu0 %886
    %890 = vset.pattern.permute.xlu0 0
    %891 = vperm.xlu0 %890, %v873
    %v892 = vpop.permute.xlu0 %891
    %v894 = vadd.f32 %v858, %v877
    %v895 = vadd.f32 %v861, %v882
    %v896 = vadd.f32 %v864, %v887
    %v897 = vadd.f32 %v867, %v892
    %v898 = vmul.f32 %v894, %v894
    %v899 = vmul.f32 %v895, %v895
    %v900 = vmul.f32 %v896, %v896
    %v901 = vmul.f32 %v897, %v897
    %v902 = vmul.f32 %v894, %v898
    %v903 = vmul.f32 %v895, %v899
    %v904 = vmul.f32 %v896, %v900
    %v905 = vmul.f32 %v897, %v901
    %v906 = vmul.f32 %v902, 0.044715
    %v907 = vmul.f32 %v903, 0.044715
    %v908 = vmul.f32 %v904, 0.044715
    %v909 = vmul.f32 %v905, 0.044715
    %v910 = vadd.f32 %v894, %v906
    %v911 = vadd.f32 %v895, %v907
    %v912 = vadd.f32 %v896, %v908
    %v913 = vadd.f32 %v897, %v909
    %v914 = vmul.f32 %v910, 0.7978846
    %v915 = vmul.f32 %v911, 0.7978846
    %v916 = vmul.f32 %v912, 0.7978846
    %v917 = vmul.f32 %v913, 0.7978846
    %v918 = vtanh.pop %v914
    %v919 = vtanh.pop %v915
    %v920 = vtanh.pop %v916
    %v921 = vtanh.pop %v917
    %v922 = vadd.f32 %v918, 1.0
    %v923 = vadd.f32 %v919, 1.0
    %v924 = vadd.f32 %v920, 1.0
    %v925 = vadd.f32 %v921, 1.0
    %v926 = vmul.f32 %v922, 0.5
    %v927 = vmul.f32 %v923, 0.5
    %v928 = vmul.f32 %v924, 0.5
    %v929 = vmul.f32 %v925, 0.5
    %v930 = vmul.f32 %v894, %v926
    %v931 = vmul.f32 %v895, %v927
    %v932 = vmul.f32 %v896, %v928
    %v933 = vmul.f32 %v897, %v929
    %s934 = scalar_lea.vmem %s5, 32
    %v935 = vld [vmem:[%s934] sm:$0xff]
    %v936 = vld [vmem:[%s934 + $0x8] sm:$0xff]
    %v937 = vld [vmem:[%s934 + $0x10] sm:$0xff]
    %v938 = vld [vmem:[%s934 + $0x18] sm:$0xff]
    %s939 = scalar_lea.vmem %s6, 64
    %v940 = vld [vmem:[%s939] sm:$0xff]
    %v941 = vld [vmem:[%s939 + $0x8] sm:$0xff]
    %v942 = vld [vmem:[%s939 + $0x10] sm:$0xff]
    %v943 = vld [vmem:[%s939 + $0x18] sm:$0xff]
    %945 = vset.pattern.permute.xlu0 0
    %946 = vperm.xlu0 %945, %v940
    %v947 = vpop.permute.xlu0 %946
    %950 = vset.pattern.permute.xlu0 0
    %951 = vperm.xlu0 %950, %v941
    %v952 = vpop.permute.xlu0 %951
    %955 = vset.pattern.permute.xlu0 0
    %956 = vperm.xlu0 %955, %v942
    %v957 = vpop.permute.xlu0 %956
    %960 = vset.pattern.permute.xlu0 0
    %961 = vperm.xlu0 %960, %v943
    %v962 = vpop.permute.xlu0 %961
    %v965 = vsel %vm700, %v935, 0
    %v968 = vsel %vm700, %v936, 0
    %v971 = vsel %vm700, %v937, 0
    %v974 = vsel %vm700, %v938, 0
    %976 = vmatpush.msra.mxu0 0.0
    %977 = vmatpush.msra.mxu0 0.0
    %978 = vmatpush.msra.mxu0 0.0
    %979 = vmatpush.msra.mxu0 0.0
    %980 = vmatpush.msra.mxu0 0.0
    %981 = vmatpush.msra.mxu0 0.0
    %982 = vmatpush.msra.mxu0 0.0
    %983 = vmatpush.msra.mxu0 0.0
    %984 = vmatpush.msra.mxu0 0.0
    %985 = vmatpush.msra.mxu0 0.0
    %986 = vmatpush.msra.mxu0 0.0
    %987 = vmatpush.msra.mxu0 0.0
    %988 = vmatpush.msra.mxu0 %v933
    %989 = vmatpush.msra.mxu0 %v932
    %990 = vmatpush.msra.mxu0 %v931
    %991 = vmatpush.msra.mxu0 %v930
    %992 = vmatmul.f32.gmra.mxu0 %v965
    %v993 = vpop.f32.mrf.mxu0
    %v994 = vadd.f32 %v947, %v993
    %995 = vmatmul.f32.gmra.mxu0 %v968
    %v996 = vpop.f32.mrf.mxu0
    %v997 = vadd.f32 %v952, %v996
    %998 = vmatmul.f32.gmra.mxu0 %v971
    %v999 = vpop.f32.mrf.mxu0
    %v1000 = vadd.f32 %v957, %v999
    %1001 = vmatmul.f32.gmra.mxu0 %v974
    %v1002 = vpop.f32.mrf.mxu0
    %v1003 = vadd.f32 %v962, %v1002
    %1004 = vdwg.mxu0
    %v1005 = vmul.f32 %v994, %v994
    %v1006 = vmul.f32 %v997, %v997
    %v1007 = vmul.f32 %v1000, %v1000
    %v1008 = vmul.f32 %v1003, %v1003
    %v1009 = vmul.f32 %v994, %v1005
    %v1010 = vmul.f32 %v997, %v1006
    %v1011 = vmul.f32 %v1000, %v1007
    %v1012 = vmul.f32 %v1003, %v1008
    %v1013 = vmul.f32 %v1009, 0.044715
    %v1014 = vmul.f32 %v1010, 0.044715
    %v1015 = vmul.f32 %v1011, 0.044715
    %v1016 = vmul.f32 %v1012, 0.044715
    %v1017 = vadd.f32 %v994, %v1013
    %v1018 = vadd.f32 %v997, %v1014
    %v1019 = vadd.f32 %v1000, %v1015
    %v1020 = vadd.f32 %v1003, %v1016
    %v1021 = vmul.f32 %v1017, 0.7978846
    %v1022 = vmul.f32 %v1018, 0.7978846
    %v1023 = vmul.f32 %v1019, 0.7978846
    %v1024 = vmul.f32 %v1020, 0.7978846
    %v1025 = vtanh.pop %v1021
    %v1026 = vtanh.pop %v1022
    %v1027 = vtanh.pop %v1023
    %v1028 = vtanh.pop %v1024
    %v1029 = vadd.f32 %v1025, 1.0
    %v1030 = vadd.f32 %v1026, 1.0
    %v1031 = vadd.f32 %v1027, 1.0
    %v1032 = vadd.f32 %v1028, 1.0
    %v1033 = vmul.f32 %v1029, 0.5
    %v1034 = vmul.f32 %v1030, 0.5
    %v1035 = vmul.f32 %v1031, 0.5
    %v1036 = vmul.f32 %v1032, 0.5
    %v1037 = vmul.f32 %v994, %v1033
    %v1038 = vmul.f32 %v997, %v1034
    %v1039 = vmul.f32 %v1000, %v1035
    %v1040 = vmul.f32 %v1003, %v1036
    %s1041 = scalar_lea.vmem %s5, 64
    %v1042 = vld [vmem:[%s1041] sm:$0xff]
    %v1043 = vld [vmem:[%s1041 + $0x8] sm:$0xff]
    %v1044 = vld [vmem:[%s1041 + $0x10] sm:$0xff]
    %v1045 = vld [vmem:[%s1041 + $0x18] sm:$0xff]
    %s1046 = scalar_lea.vmem %s6, 96
    %v1047 = vld [vmem:[%s1046] sm:$0xff]
    %v1048 = vld [vmem:[%s1046 + $0x8] sm:$0xff]
    %v1049 = vld [vmem:[%s1046 + $0x10] sm:$0xff]
    %v1050 = vld [vmem:[%s1046 + $0x18] sm:$0xff]
    %1052 = vset.pattern.permute.xlu0 0
    %1053 = vperm.xlu0 %1052, %v1047
    %v1054 = vpop.permute.xlu0 %1053
    %1057 = vset.pattern.permute.xlu0 0
    %1058 = vperm.xlu0 %1057, %v1048
    %v1059 = vpop.permute.xlu0 %1058
    %1062 = vset.pattern.permute.xlu0 0
    %1063 = vperm.xlu0 %1062, %v1049
    %v1064 = vpop.permute.xlu0 %1063
    %1067 = vset.pattern.permute.xlu0 0
    %1068 = vperm.xlu0 %1067, %v1050
    %v1069 = vpop.permute.xlu0 %1068
    %v1072 = vsel %vm700, %v1042, 0
    %v1075 = vsel %vm700, %v1043, 0
    %v1078 = vsel %vm700, %v1044, 0
    %v1081 = vsel %vm700, %v1045, 0
    %1083 = vmatpush.msra.mxu0 0.0
    %1084 = vmatpush.msra.mxu0 0.0
    %1085 = vmatpush.msra.mxu0 0.0
    %1086 = vmatpush.msra.mxu0 0.0
    %1087 = vmatpush.msra.mxu0 0.0
    %1088 = vmatpush.msra.mxu0 0.0
    %1089 = vmatpush.msra.mxu0 0.0
    %1090 = vmatpush.msra.mxu0 0.0
    %1091 = vmatpush.msra.mxu0 0.0
    %1092 = vmatpush.msra.mxu0 0.0
    %1093 = vmatpush.msra.mxu0 0.0
    %1094 = vmatpush.msra.mxu0 0.0
    %1095 = vmatpush.msra.mxu0 %v1040
    %1096 = vmatpush.msra.mxu0 %v1039
    %1097 = vmatpush.msra.mxu0 %v1038
    %1098 = vmatpush.msra.mxu0 %v1037
    %1099 = vmatmul.f32.gmra.mxu0 %v1072
    %v1100 = vpop.f32.mrf.mxu0
    %v1101 = vadd.f32 %v1054, %v1100
    %1102 = vmatmul.f32.gmra.mxu0 %v1075
    %v1103 = vpop.f32.mrf.mxu0
    %v1104 = vadd.f32 %v1059, %v1103
    %1105 = vmatmul.f32.gmra.mxu0 %v1078
    %v1106 = vpop.f32.mrf.mxu0
    %v1107 = vadd.f32 %v1064, %v1106
    %1108 = vmatmul.f32.gmra.mxu0 %v1081
    %v1109 = vpop.f32.mrf.mxu0
    %v1110 = vadd.f32 %v1069, %v1109
    %1111 = vdwg.mxu0
    %v1112 = vmul.f32 %v1101, %v1101
    %v1113 = vmul.f32 %v1104, %v1104
    %v1114 = vmul.f32 %v1107, %v1107
    %v1115 = vmul.f32 %v1110, %v1110
    %v1116 = vmul.f32 %v1101, %v1112
    %v1117 = vmul.f32 %v1104, %v1113
    %v1118 = vmul.f32 %v1107, %v1114
    %v1119 = vmul.f32 %v1110, %v1115
    %v1120 = vmul.f32 %v1116, 0.044715
    %v1121 = vmul.f32 %v1117, 0.044715
    %v1122 = vmul.f32 %v1118, 0.044715
    %v1123 = vmul.f32 %v1119, 0.044715
    %v1124 = vadd.f32 %v1101, %v1120
    %v1125 = vadd.f32 %v1104, %v1121
    %v1126 = vadd.f32 %v1107, %v1122
    %v1127 = vadd.f32 %v1110, %v1123
    %v1128 = vmul.f32 %v1124, 0.7978846
    %v1129 = vmul.f32 %v1125, 0.7978846
    %v1130 = vmul.f32 %v1126, 0.7978846
    %v1131 = vmul.f32 %v1127, 0.7978846
    %v1132 = vtanh.pop %v1128
    %v1133 = vtanh.pop %v1129
    %v1134 = vtanh.pop %v1130
    %v1135 = vtanh.pop %v1131
    %v1136 = vadd.f32 %v1132, 1.0
    %v1137 = vadd.f32 %v1133, 1.0
    %v1138 = vadd.f32 %v1134, 1.0
    %v1139 = vadd.f32 %v1135, 1.0
    %v1140 = vmul.f32 %v1136, 0.5
    %v1141 = vmul.f32 %v1137, 0.5
    %v1142 = vmul.f32 %v1138, 0.5
    %v1143 = vmul.f32 %v1139, 0.5
    %v1144 = vmul.f32 %v1101, %v1140
    %v1145 = vmul.f32 %v1104, %v1141
    %v1146 = vmul.f32 %v1107, %v1142
    %v1147 = vmul.f32 %v1110, %v1143
    %v1148 = vld [vmem:[%s7] sm:$0xff]
    %v1149 = vld [vmem:[%s7 + $0x8] sm:$0xff]
    %v1150 = vld [vmem:[%s7 + $0x10] sm:$0xff]
    %v1151 = vld [vmem:[%s7 + $0x18] sm:$0xff]
    %1153 = vset.pattern.permute.xlu0 0
    %1154 = vperm.xlu0 %1153, %v1148
    %v1155 = vpop.permute.xlu0 %1154
    %1158 = vset.pattern.permute.xlu0 0
    %1159 = vperm.xlu0 %1158, %v1149
    %v1160 = vpop.permute.xlu0 %1159
    %1163 = vset.pattern.permute.xlu0 0
    %1164 = vperm.xlu0 %1163, %v1150
    %v1165 = vpop.permute.xlu0 %1164
    %1168 = vset.pattern.permute.xlu0 0
    %1169 = vperm.xlu0 %1168, %v1151
    %v1170 = vpop.permute.xlu0 %1169
    %v1172 = vmul.f32 %v1155, %v1144
    %v1173 = vmul.f32 %v1160, %v1145
    %v1174 = vmul.f32 %v1165, %v1146
    %v1175 = vmul.f32 %v1170, %v1147
    %v1176 = vadd.f32 %v1172, %v1173
    %v1177 = vadd.f32 %v1176, %v1174
    %v1178 = vadd.f32 %v1177, %v1175
    %v1179 = vrot.slane %v1178, 4
    %v1180 = vadd.f32 %v1178, %v1179
    %v1181 = vrot.slane %v1180, 2
    %v1182 = vadd.f32 %v1180, %v1181
    %v1183 = vrot.slane %v1182, 1
    %v1184 = vadd.f32 %v1182, %v1183
    %s1185 = sld [smem:[#allocation2]]
    %v1186 = vstv %s1185
    %v1187 = vadd.f32 %v1184, %v1186
    %v1188 = vmul.f32 %v35, 2.0
    %v1189 = vsub.f32 %v1188, 1.0
    %v1190 = vrot.slane %v1189, 1
    %v1191 = vmul.f32 %v1189, %v1190
    %v1192 = vrot.slane %v1191, 4
    %v1193 = vadd.f32 %v1191, %v1192
    %v1194 = vrot.slane %v1193, 2
    %v1195 = vadd.f32 %v1193, %v1194
    %v1196 = vrot.slane %v1195, 1
    %v1197 = vadd.f32 %v1195, %v1196
    %v1198 = vsub.f32 %v1197, %v1191
    %v1199 = vadd.f32 %v1198, %v1187
    %1200 = vst [vmem:[#allocation3 - $0x7] sm:$0x80] %v1199
    // Predicated region
    $region38: #{tpu_custom_call.1} parent=1 // pred_check
      _
    $region39: #{tpu_custom_call.1} parent=1 // pred_check_branch
      %1202 = sbr.rel (0) target = $region41
    $region40: #{tpu_custom_call.1} parent=1 // pred_region
      %1204 = vsyncadd [#allocation4], 0
      %s1206 = sshll.u32 [#allocation3], 4
      %s1207 = int_to_ptr.vmem [resolvable:$true] %s1206
      %s1208 = sshll.u32 %s9, 4
      %s1209 = int_to_ptr.hbm [resolvable:$true] %s1208
      %1211 = dma.vmem_to_hbm [thread:$0]  %s1207, 16, %s1209, [#allocation4]
    $region41: #{tpu_custom_call.1} parent=1 // pred_fallthru
      _
    // Predicated region
    $region42: #{tpu_custom_call.1} parent=1 // pred_check
      _
    $region43: #{tpu_custom_call.1} parent=1 // pred_check_branch
      %1213 = sbr.rel (0) target = $region45
    $region44: #{tpu_custom_call.1} parent=1 // pred_region
      %1215 = dma.done [#allocation4], 16
    $region45: #{tpu_custom_call.1} parent=1 // pred_fallthru
      _
    %1216 = vsyncpa [#allocation4], 1

</llo_original>
